<compile_context>
chip_gen: v7x
topology: tpu7x:2x2x1
jax: 0.10.0
libtpu: 0.0.40
codegen_flags: <defaults>
</compile_context>

<pallas_src>
import functools

import jax
import jax.numpy as jnp
import numpy as np
from jax.experimental import pallas as pl
from jax.experimental.pallas import tpu as pltpu


def _round_up(x, m):
    return (x + m - 1) // m * m


@functools.lru_cache(maxsize=None)
def _roll_is_jnp_convention():
    """pltpu.roll is expected to match jnp.roll (out[i] = in[(i - shift) % n]).

    Probe the rotate direction once on-device so the tap <-> shift pairing in
    the conv kernel is robust to the backend's rotation convention.
    """
    def probe(x_ref, o_ref):
        o_ref[...] = pltpu.roll(x_ref[...], 1, 1)

    x = jnp.tile(jnp.arange(128, dtype=jnp.float32)[None, :], (8, 1))
    out = pl.pallas_call(
        probe, out_shape=jax.ShapeDtypeStruct((8, 128), jnp.float32))(x)
    v = float(out[0, 0])
    if v == 127.0:      # jnp.roll convention
        return True
    if v == 1.0:        # opposite convention
        return False
    raise RuntimeError(f"unexpected pltpu.roll behaviour (out[0,0]={v})")


def _make_fused_kernel(H, W, Cin, Chid, K, CP, matmul_dtype, roll_is_jnp):
    """Fused Res_Conv2 kernel for one batch element.

    Refs (all channel-major, spatial flattened onto the lane axis):
      x_ref  : (1, Cin, H*W)  f32 input (also the residual branch)
      w1_ref : (Chid, K*K*CP) conv1 weights, tap-major, channel-padded to CP
      s1/b1  : (Chid, 1)      folded BN1 scale/shift
      w2_ref : (Cin,  K*K*CP) conv2 weights
      s2/b2  : (Cin, 1)       folded BN2 scale/shift
      sr/br  : (Cin, 1)       folded residual-BN scale/shift
      out_ref: (1, Cin, H*W)
      col_ref: (K*K*CP, H*W)  f32 im2col VMEM scratch (shared by both convs)
    """
    HW = H * W

    def lane_shift(a, s):
        """Returns b with b[:, p] = a[:, (p + s) % HW] (circular)."""
        if s % HW == 0:
            return a
        shift = (-s) % HW if roll_is_jnp else s % HW
        return pltpu.roll(a, shift, 1)

    def kernel(x_ref, w1_ref, s1_ref, b1_ref, w2_ref, s2_ref, b2_ref,
               sr_ref, br_ref, out_ref, col_ref):
        x = x_ref[0]                                     # (Cin, HW) f32

        # The channel-padded rows of the im2col scratch must be zero (their
        # weight columns are zero, but uninitialized VMEM could hold inf/nan).
        col_ref[...] = jnp.zeros_like(col_ref)

        def gather_taps(a, c):
            """Scatter the 9 shifted + boundary-masked copies of `a` (c, HW)
            into im2col scratch rows [t*CP, t*CP + c) for tap t = kh*K + kw."""
            flat = jax.lax.broadcasted_iota(jnp.int32, (c, HW), 1)
            row = flat // W
            colp = flat % W
            for kh in range(K):
                dh = kh - K // 2
                for kw in range(K):
                    dw = kw - K // 2
                    t = kh * K + kw
                    shifted = lane_shift(a, dh * W + dw)   # XLU, overlaps MXU
                    valid = ((row + dh >= 0) & (row + dh < H) &
                             (colp + dw >= 0) & (colp + dw < W))
                    col_ref[t * CP:t * CP + c, :] = jnp.where(valid, shifted, 0.0)

        def conv_bn_lrelu(w_ref, s_ref, b_ref):
            # single deep-contraction MXU matmul: (Cout, K*K*CP) @ (K*K*CP, HW)
            acc = jnp.dot(w_ref[...], col_ref[...].astype(matmul_dtype),
                          preferred_element_type=jnp.float32)
            acc = acc * s_ref[...] + b_ref[...]            # folded BN (eval)
            return jnp.where(acc > 0, acc, 0.2 * acc)      # LeakyReLU(0.2)

        gather_taps(x, Cin)
        h = conv_bn_lrelu(w1_ref, s1_ref, b1_ref)          # (Chid, HW), VMEM only
        gather_taps(h, Chid)
        y = conv_bn_lrelu(w2_ref, s2_ref, b2_ref)          # (Cin, HW)
        y = y + x * sr_ref[...] + br_ref[...]              # + BN_res(x), f32
        out_ref[...] = y.reshape(1, Cin, HW)               # lane-dense store

    return kernel


def _fold_bn(gamma, beta, mean, var, eps=1e-5):
    scale = gamma / jnp.sqrt(var + eps)
    shift = beta - mean * scale
    return (scale.reshape(-1, 1).astype(jnp.float32),
            shift.reshape(-1, 1).astype(jnp.float32))


def _pack_weight(w_oihw, cpad, dtype):
    """PyTorch (Cout, Cin, K, K) -> (Cout, K*K*cpad), tap-major, channel-padded."""
    cout, cin, k, _ = w_oihw.shape
    w = jnp.transpose(w_oihw, (0, 2, 3, 1))                  # (Cout, K, K, Cin)
    w = jnp.pad(w, ((0, 0), (0, 0), (0, 0), (0, cpad - cin)))
    return w.reshape(cout, k * k * cpad).astype(dtype)


def res_conv2_forward(x_nchw, params, *, matmul_dtype=jnp.bfloat16):
    """Pallas implementation of Res_Conv2.forward. Input/output are NCHW f32."""
    x = x_nchw.astype(jnp.float32)
    N, Cin, H, W = x.shape
    Chid = params["w1"].shape[0]
    K = params["w1"].shape[2]
    HW = H * W
    CP = max(_round_up(Cin, 8), _round_up(Chid, 8))          # padded channel chunk

    w1 = _pack_weight(params["w1"], CP, matmul_dtype)        # (Chid, K*K*CP)
    w2 = _pack_weight(params["w2"], CP, matmul_dtype)        # (Cin,  K*K*CP)
    s1, b1 = _fold_bn(params["bn1_gamma"], params["bn1_beta"],
                      params["bn1_mean"], params["bn1_var"])
    s2, b2 = _fold_bn(params["bn2_gamma"], params["bn2_beta"],
                      params["bn2_mean"], params["bn2_var"])
    sr, br = _fold_bn(params["bnr_gamma"], params["bnr_beta"],
                      params["bnr_mean"], params["bnr_var"])

    x_flat = x.reshape(N, Cin, HW)                           # free reshape (stays NCHW)

    kernel = _make_fused_kernel(H, W, Cin, Chid, K, CP, matmul_dtype,
                                _roll_is_jnp_convention())

    full = lambda n: (0, 0)
    per_n = lambda n: (n, 0, 0)
    out = pl.pallas_call(
        kernel,
        out_shape=jax.ShapeDtypeStruct((N, Cin, HW), jnp.float32),
        grid=(N,),
        in_specs=[
            pl.BlockSpec((1, Cin, HW), per_n),               # x (per batch element)
            pl.BlockSpec((Chid, K * K * CP), full),          # w1
            pl.BlockSpec((Chid, 1), full),                   # bn1 scale
            pl.BlockSpec((Chid, 1), full),                   # bn1 shift
            pl.BlockSpec((Cin, K * K * CP), full),           # w2
            pl.BlockSpec((Cin, 1), full),                    # bn2 scale
            pl.BlockSpec((Cin, 1), full),                    # bn2 shift
            pl.BlockSpec((Cin, 1), full),                    # bn_res scale
            pl.BlockSpec((Cin, 1), full),                    # bn_res shift
        ],
        out_specs=pl.BlockSpec((1, Cin, HW), per_n),
        scratch_shapes=[pltpu.VMEM((K * K * CP, HW), jnp.float32)],
        compiler_params=pltpu.CompilerParams(
            dimension_semantics=("parallel",)),              # batch shards across TCs
    )(x_flat, w1, s1, b1, w2, s2, b2, sr, br)

    return out.reshape(N, Cin, H, W)                         # free reshape back to NCHW


# ----------------------- pure-JAX reference (for checking) -----------------------
def _ref_forward(x_nchw, params, eps=1e-5):
    def conv(x, w):
        return jax.lax.conv_general_dilated(
            x, w, window_strides=(1, 1), padding=((1, 1), (1, 1)),
            dimension_numbers=("NCHW", "OIHW", "NCHW"))

    def bn(x, g, b, m, v):
        g, b, m, v = [a.reshape(1, -1, 1, 1) for a in (g, b, m, v)]
        return g * (x - m) / jnp.sqrt(v + eps) + b

    def lrelu(x):
        return jnp.where(x > 0, x, 0.2 * x)

    h = lrelu(bn(conv(x_nchw, params["w1"]), params["bn1_gamma"],
                 params["bn1_beta"], params["bn1_mean"], params["bn1_var"]))
    y = lrelu(bn(conv(h, params["w2"]), params["bn2_gamma"],
                 params["bn2_beta"], params["bn2_mean"], params["bn2_var"]))
    r = bn(x_nchw, params["bnr_gamma"], params["bnr_beta"],
           params["bnr_mean"], params["bnr_var"])
    return y + r


def _init_params(key, ch_in, ch_hidden, k=3):
    keys = jax.random.split(key, 14)
    f = jnp.float32

    def bn_params(k0, k1, k2, k3, c):
        gamma = 1.0 + 0.1 * jax.random.normal(k0, (c,), f)
        beta = 0.1 * jax.random.normal(k1, (c,), f)
        mean = 0.1 * jax.random.normal(k2, (c,), f)
        var = 0.5 + 0.5 * jnp.abs(jax.random.normal(k3, (c,), f))
        return gamma, beta, mean, var

    w1 = 0.1 * jax.random.normal(keys[0], (ch_hidden, ch_in, k, k), f)
    w2 = 0.1 * jax.random.normal(keys[1], (ch_in, ch_hidden, k, k), f)
    g1, b1, m1, v1 = bn_params(keys[2], keys[3], keys[4], keys[5], ch_hidden)
    g2, b2, m2, v2 = bn_params(keys[6], keys[7], keys[8], keys[9], ch_in)
    gr, br_, mr, vr = bn_params(keys[10], keys[11], keys[12], keys[13], ch_in)
    return dict(w1=w1, w2=w2,
                bn1_gamma=g1, bn1_beta=b1, bn1_mean=m1, bn1_var=v1,
                bn2_gamma=g2, bn2_beta=b2, bn2_mean=m2, bn2_var=v2,
                bnr_gamma=gr, bnr_beta=br_, bnr_mean=mr, bnr_var=vr)


if __name__ == "__main__":
    # Res_Conv2(ch_in=4, ch_hidden=8, kernel_size=3, stride=1, padding=1)
    N, CH_IN, CH_HID, H, W = 2, 4, 8, 16, 16

    key = jax.random.PRNGKey(0)
    k_x, k_p = jax.random.split(key)
    x = jax.random.normal(k_x, (N, CH_IN, H, W), jnp.float32)   # NCHW like PyTorch
    params = _init_params(k_p, CH_IN, CH_HID)

    ref = jax.block_until_ready(_ref_forward(x, params))

    # Exact path: f32 MXU operands -> strict check.
    out_f32 = jax.block_until_ready(
        res_conv2_forward(x, params, matmul_dtype=jnp.float32))
    assert out_f32.shape == (N, CH_IN, H, W), out_f32.shape
    np.testing.assert_allclose(np.asarray(out_f32), np.asarray(ref),
                               rtol=1e-4, atol=1e-5)

    # Performance path (default): bf16 MXU operands, f32 accumulation/epilogue.
    out_bf16 = jax.block_until_ready(res_conv2_forward(x, params))
    np.testing.assert_allclose(np.asarray(out_bf16), np.asarray(ref),
                               rtol=5e-2, atol=5e-2)

    print("KERNEL_OK")
</pallas_src>

<mosaic_0001>
module attributes {stable_mosaic.version = 11 : i64} {
  func.func @probe(%arg0: memref<8x128xf32, #tpu.memory_space<vmem>>, %arg1: memref<8x128xf32, #tpu.memory_space<vmem>>) attributes {dimension_semantics = [], scalar_prefetch = 0 : i64, scratch_operands = 0 : i64, tpu.core_type = #tpu.core_type<tc>} {
    %c0 = arith.constant 0 : index
    %c0_0 = arith.constant 0 : index
    %0 = vector.load %arg0[%c0, %c0_0] : memref<8x128xf32, #tpu.memory_space<vmem>>, vector<8x128xf32>
    %c1_i32 = arith.constant 1 : i32
    %1 = tpu.dynamic_rotate %0 by %c1_i32 dim 1 : vector<8x128xf32>, i32 -> vector<8x128xf32>
    %c0_1 = arith.constant 0 : index
    %c0_2 = arith.constant 0 : index
    %2 = vector.load %arg1[%c0_1, %c0_2] : memref<8x128xf32, #tpu.memory_space<vmem>>, vector<8x128xf32>
    tpu.vector_store %arg1[%c0_1, %c0_2], %1 {strides = array<i32>} : memref<8x128xf32, #tpu.memory_space<vmem>>, vector<8x128xf32>,
    return
  }
}

</mosaic_0001>

<llo_original>
// kernel: tpu_custom_call.1
$region0: #{tpu_custom_call.1}
  #allocation0 [shape = 'u32[]', space=smem, size = 0x4, offset = 0x4, fixed_abs, tag = 'smem constant byte address 0x4 - core index']
  #allocation1 [shape = 'u32[144,128]{1,0:T(1,128)}', space=vmem, size = 0x12000, scoped, tag = 'internal scratch']
  %s0 = inlined_call_operand.hbm [shape: f32[8,128], index: 0, kind: input, shape index: {}]
  %s1 = inlined_call_operand.hbm [shape: f32[8,128], index: 1, kind: output, shape index: {}]
  %s2 = sld [smem:[#allocation0]]
  $region18: #{tpu_custom_call.1} parent=0
    _
  %s4 = ssub.s32 1, %s2
  %s5 = scalar_select 0, %s4, %s2
  $region1: #{tpu_custom_call.1} parent=0
    #allocation2 [shape = 'u8[4096]{0}', space=vmem, size = 0x1000, scoped, tag = 'input window, operand 0, single buffered']
    #allocation3 [shape = 's32[1]{0}', space=sflag, size = 0x4, scoped, tag = 'scoped memory for tpu_custom_call.1']
    #allocation4 [shape = 's32[1]{0}', space=sflag, size = 0x4, scoped, tag = 'scoped memory for tpu_custom_call.1']
    #allocation5 [shape = 'u8[4096]{0}', space=vmem, size = 0x1000, scoped, tag = 'output window, operand 0, single buffered']
    %6 = vsyncpa [#allocation3], 0
    %7 = vsyncpa [#allocation4], 0
    // Predicated region
    $region2: #{tpu_custom_call.1} parent=1 // pred_check
      _
    $region3: #{tpu_custom_call.1} parent=1 // pred_check_branch
      %9 = sbr.rel (0) target = $region5
    $region4: #{tpu_custom_call.1} parent=1 // pred_region
      %s11 = ssub.s32 128, 128
      %12 = vsyncadd [#allocation3], %s11
      %s14 = sshll.u32 [#allocation2], 4
      %s15 = int_to_ptr.vmem [resolvable:$true] %s14
      %17 = dma.hbm_to_vmem [thread:$0]  %s0, 128, %s15, [#allocation3]
    $region5: #{tpu_custom_call.1} parent=1 // pred_fallthru
      _
    // Predicated region
    $region6: #{tpu_custom_call.1} parent=1 // pred_check
      _
    $region7: #{tpu_custom_call.1} parent=1 // pred_check_branch
      %19 = sbr.rel (0) target = $region9
    $region8: #{tpu_custom_call.1} parent=1 // pred_region
      %20 = dma.done [#allocation3], 128
    $region9: #{tpu_custom_call.1} parent=1 // pred_fallthru
      _
    %v21 = vld [vmem:[#allocation2] sm:$0xff]
    %22 = vrot.lane.b32.xlu0 %v21, 1
    %v23 = vpop.permute.xlu0 %22
    %24 = vst [vmem:[#allocation5] sm:$0xff] %v23
    // Predicated region
    $region10: #{tpu_custom_call.1} parent=1 // pred_check
      _
    $region11: #{tpu_custom_call.1} parent=1 // pred_check_branch
      %26 = sbr.rel (0) target = $region13
    $region12: #{tpu_custom_call.1} parent=1 // pred_region
      %s28 = ssub.s32 128, 128
      %29 = vsyncadd [#allocation4], %s28
      %s31 = sshll.u32 [#allocation5], 4
      %s32 = int_to_ptr.vmem [resolvable:$true] %s31
      %34 = dma.vmem_to_hbm [thread:$0]  %s32, 128, %s1, [#allocation4]
    $region13: #{tpu_custom_call.1} parent=1 // pred_fallthru
      _
    // Predicated region
    $region14: #{tpu_custom_call.1} parent=1 // pred_check
      _
    $region15: #{tpu_custom_call.1} parent=1 // pred_check_branch
      %36 = sbr.rel (0) target = $region17
    $region16: #{tpu_custom_call.1} parent=1 // pred_region
      %37 = dma.done [#allocation4], 128
    $region17: #{tpu_custom_call.1} parent=1 // pred_fallthru
      _
    %38 = vsyncpa [#allocation3], 1
    %39 = vsyncpa [#allocation4], 1

</llo_original>
